<compile_context>
chip_gen: v6e
topology: v6e:2x2x1
jax: 0.10.0
libtpu: 0.0.40
codegen_flags: <defaults>
</compile_context>

<pallas_src>
import math

import jax
import jax.numpy as jnp
from jax.experimental import pallas as pl
from jax.experimental.pallas import tpu as pltpu

EPS = 1e-5  # nn.BatchNorm1d default


def _cdiv(a, b):
    return -(-a // b)


def _round_down(a, b):
    return (a // b) * b


def _make_stats_kernel(R, tile_r, d_lane, acc_rows, steps_per_core, need_mask):
    def kernel(x_ref, sum_ref, sq_ref):
        c = pl.program_id(0)   # core (partial-accumulator) axis
        i = pl.program_id(1)   # row-tile axis (reduction, "arbitrary")

        @pl.when(i == 0)
        def _init():
            sum_ref[...] = jnp.zeros_like(sum_ref)
            sq_ref[...] = jnp.zeros_like(sq_ref)

        x = x_ref[...].astype(jnp.float32)
        if need_mask:
            # Zero rows past the valid range: covers both the ragged last tile
            # (R % tile_r != 0) and clamped duplicate tiles on the short core.
            step = c * steps_per_core + i
            valid = R - step * tile_r
            row_ids = jax.lax.broadcasted_iota(jnp.int32, (tile_r, d_lane), 0)
            x = jnp.where(row_ids < valid, x, 0.0)

        if acc_rows == 1:
            sum_ref[...] += jnp.sum(x, axis=0, keepdims=True)
            sq_ref[...] += jnp.sum(x * x, axis=0, keepdims=True)
        else:
            # Keep a full vreg of sublanes resident: plain VPU adds per tile,
            # unmasked accumulator stores.  Final 8-sublane fold happens in the
            # (tiny) XLA finalize.
            xr = x.reshape(tile_r // acc_rows, acc_rows, d_lane)
            sum_ref[...] += jnp.sum(xr, axis=0)
            sq_ref[...] += jnp.sum(xr * xr, axis=0)

    return kernel


def _normalize_kernel(x_ref, scale_ref, shift_ref, o_ref):
    # Pure streaming elementwise: y = x*scale + shift.  scale/shift blocks have
    # a constant index => fetched once and stay resident.
    x = x_ref[...].astype(jnp.float32)
    o_ref[...] = (x * scale_ref[...] + shift_ref[...]).astype(o_ref.dtype)


def normalization_batch(x, gamma, beta):
    """Training-mode BatchNorm1d(embed_dim) applied exactly like the PyTorch
    module's 'batch' branch: flatten (B,S,D) -> (-1,D), normalize per feature
    with biased variance, affine transform, reshape back."""
    B, S, D = x.shape
    N = B * S
    itemsize = jnp.dtype(x.dtype).itemsize
    sublane = {1: 32, 2: 16, 4: 8}.get(itemsize, 8)

    # Lane-dense packing: fold k consecutive rows into the lane axis so the
    # last dim is a multiple of 128 (unmasked vst, full lane utilization).
    # The repack is a contiguous row-major reshape => zero-copy in XLA.
    if D % 128 == 0:
        k = 1
    elif D < 128 and 128 % D == 0 and N % (128 // D) == 0:
        k = 128 // D
    else:
        # TODO(synk): generalize lane packing for D not dividing 128 / ragged N
        # (falls back to unpacked layout; correct but uses masked stores).
        k = 1
    d_lane = k * D
    R = N // k

    # Row tiling of the packed (R, d_lane) view: ~4 MiB blocks (roofline knee),
    # rounded to the dtype's sublane multiple.  No padding of R: Pallas masks
    # the partial last block; pass 1 additionally masks in-kernel.
    target_block_bytes = 4 * 1024 * 1024
    if R <= sublane:
        tile_r = R
    else:
        t = _round_down(target_block_bytes // (d_lane * itemsize), sublane)
        tile_r = max(sublane, min(t, _round_down(R, sublane)))
    n_steps = _cdiv(R, tile_r)

    # Split the pass-1 reduction across 2 TensorCores (v7x); harmless on 1-TC
    # chips where both core-slices just run sequentially.
    ncores = 2 if n_steps >= 2 else 1
    steps_per_core = _cdiv(n_steps, ncores)
    acc_rows = 8 if tile_r % 8 == 0 else 1
    need_mask = (R % tile_r != 0) or (ncores * steps_per_core != n_steps)

    # VMEM budget: pass 2 holds input + output, each double-buffered (~4x tile)
    # plus resident scale/shift; keep comfortably under v7x's 64 MiB.
    tile_bytes = tile_r * d_lane * itemsize
    vmem_limit = int(min(max(6 * tile_bytes, 16 * 1024 * 1024), 96 * 1024 * 1024))

    x_packed = x.reshape(R, d_lane)

    def stats_in_map(c, i):
        # Clamp so the short core never addresses a fully out-of-bounds block;
        # the duplicated read is zero-masked in-kernel.
        return (jnp.minimum(c * steps_per_core + i, n_steps - 1), 0)

    # ---- pass 1: per-feature sum and sum-of-squares over all rows ----
    sum_parts, sq_parts = pl.pallas_call(
        _make_stats_kernel(R, tile_r, d_lane, acc_rows, steps_per_core, need_mask),
        out_shape=(
            jax.ShapeDtypeStruct((ncores, acc_rows, d_lane), jnp.float32),
            jax.ShapeDtypeStruct((ncores, acc_rows, d_lane), jnp.float32),
        ),
        grid_spec=pltpu.PrefetchScalarGridSpec(
            num_scalar_prefetch=0,
            grid=(ncores, steps_per_core),
            in_specs=[pl.BlockSpec((tile_r, d_lane), stats_in_map)],
            out_specs=(
                pl.BlockSpec((None, acc_rows, d_lane), lambda c, i: (c, 0, 0)),
                pl.BlockSpec((None, acc_rows, d_lane), lambda c, i: (c, 0, 0)),
            ),
        ),
        compiler_params=pltpu.CompilerParams(
            dimension_semantics=("parallel", "arbitrary"),
            vmem_limit_bytes=vmem_limit,
        ),
    )(x_packed)

    # ---- tiny finalize (length-D math, fused by XLA): fold core/sublane/lane
    # replicas, var = E[x^2] - mean^2 (clamped, f32), scale/shift folding ----
    sum_d = jnp.sum(sum_parts.reshape(-1, k, D), axis=(0, 1))
    sq_d = jnp.sum(sq_parts.reshape(-1, k, D), axis=(0, 1))
    inv_n = 1.0 / N
    mean = sum_d * inv_n
    var = jnp.maximum(sq_d * inv_n - mean * mean, 0.0)
    inv_std = jax.lax.rsqrt(var + EPS)
    scale = gamma.astype(jnp.float32) * inv_std
    shift = beta.astype(jnp.float32) - mean * scale
    scale_lane = jnp.tile(scale, (k,)).reshape(1, d_lane)
    shift_lane = jnp.tile(shift, (k,)).reshape(1, d_lane)

    # ---- pass 2: streaming normalize, row tiles independent ("parallel") ----
    out_packed = pl.pallas_call(
        _normalize_kernel,
        out_shape=jax.ShapeDtypeStruct((R, d_lane), x.dtype),
        grid_spec=pltpu.PrefetchScalarGridSpec(
            num_scalar_prefetch=0,
            grid=(n_steps,),
            in_specs=[
                pl.BlockSpec((tile_r, d_lane), lambda i: (i, 0)),
                pl.BlockSpec((1, d_lane), lambda i: (0, 0)),
                pl.BlockSpec((1, d_lane), lambda i: (0, 0)),
            ],
            out_specs=pl.BlockSpec((tile_r, d_lane), lambda i: (i, 0)),
        ),
        compiler_params=pltpu.CompilerParams(
            dimension_semantics=("parallel",),
            vmem_limit_bytes=vmem_limit,
        ),
    )(x_packed, scale_lane, shift_lane)

    # Inverse of the zero-copy packing reshape.
    return out_packed.reshape(B, S, D)


def _reference(x, gamma, beta):
    # Pure-JAX reference of training-mode BatchNorm1d on the flattened view.
    B, S, D = x.shape
    x2d = x.reshape(-1, D).astype(jnp.float32)
    mean = jnp.mean(x2d, axis=0, keepdims=True)
    var = jnp.mean((x2d - mean) ** 2, axis=0, keepdims=True)
    y = (x2d - mean) / jnp.sqrt(var + EPS) * gamma + beta
    return y.reshape(B, S, D)


if __name__ == "__main__":
    key = jax.random.PRNGKey(0)
    B, S, D = 2, 8, 32  # (batch, seq, embed_dim)

    kx, kg, kb = jax.random.split(key, 3)
    x = jax.random.normal(kx, (B, S, D), dtype=jnp.float32)

    # Deterministic parameter init mirroring Normalization.init_parameters:
    # uniform(-stdv, stdv) with stdv = 1/sqrt(embed_dim).
    stdv = 1.0 / math.sqrt(D)
    gamma = jax.random.uniform(kg, (D,), minval=-stdv, maxval=stdv, dtype=jnp.float32)
    beta = jax.random.uniform(kb, (D,), minval=-stdv, maxval=stdv, dtype=jnp.float32)

    # TODO(synk): running_mean/running_var buffer updates (training-state side
    # effects of nn.BatchNorm1d) are not materialized; only the forward output is.
    fn = jax.jit(normalization_batch)
    out = fn(x, gamma, beta)
    jax.block_until_ready(out)

    ref = _reference(x, gamma, beta)
    assert out.shape == (B, S, D)
    assert jnp.allclose(out, ref, atol=1e-5, rtol=1e-5), "mismatch vs reference"

    print("KERNEL_OK")
</pallas_src>

<mosaic_0001>
module attributes {stable_mosaic.version = 11 : i64} {
  func.func @_normalize_kernel(%arg0: i32, %arg1: memref<4x128xf32, #tpu.memory_space<vmem>>, %arg2: memref<1x128xf32, #tpu.memory_space<vmem>>, %arg3: memref<1x128xf32, #tpu.memory_space<vmem>>, %arg4: memref<4x128xf32, #tpu.memory_space<vmem>>) attributes {dimension_semantics = [#tpu.dimension_semantics<parallel>], iteration_bounds = array<i64: 1>, scalar_prefetch = 0 : i64, scratch_operands = 0 : i64, tpu.core_type = #tpu.core_type<tc>, window_params = [{transform_indices = @transform_0, window_bounds = array<i64: 4, 128>}, {pipeline_mode = #tpu.pipeline_mode<synchronous>, transform_indices = @transform_1, window_bounds = array<i64: 1, 128>}, {pipeline_mode = #tpu.pipeline_mode<synchronous>, transform_indices = @transform_2, window_bounds = array<i64: 1, 128>}, {transform_indices = @transform_3, window_bounds = array<i64: 4, 128>}]} {
    %c0 = arith.constant 0 : index
    %c0_0 = arith.constant 0 : index
    %0 = vector.load %arg1[%c0, %c0_0] : memref<4x128xf32, #tpu.memory_space<vmem>>, vector<4x128xf32>
    %c0_1 = arith.constant 0 : index
    %c0_2 = arith.constant 0 : index
    %1 = vector.load %arg2[%c0_1, %c0_2] : memref<1x128xf32, #tpu.memory_space<vmem>>, vector<1x128xf32>
    %2 = vector.broadcast %1 : vector<1x128xf32> to vector<4x128xf32>
    %3 = arith.mulf %0, %2 : vector<4x128xf32>
    %c0_3 = arith.constant 0 : index
    %c0_4 = arith.constant 0 : index
    %4 = vector.load %arg3[%c0_3, %c0_4] : memref<1x128xf32, #tpu.memory_space<vmem>>, vector<1x128xf32>
    %5 = vector.broadcast %4 : vector<1x128xf32> to vector<4x128xf32>
    %6 = arith.addf %3, %5 : vector<4x128xf32>
    %c0_5 = arith.constant 0 : index
    %c0_6 = arith.constant 0 : index
    %7 = vector.load %arg4[%c0_5, %c0_6] : memref<4x128xf32, #tpu.memory_space<vmem>>, vector<4x128xf32>
    tpu.vector_store %arg4[%c0_5, %c0_6], %6 {strides = array<i32>} : memref<4x128xf32, #tpu.memory_space<vmem>>, vector<4x128xf32>,
    return
  }
  func.func @transform_0(%arg0: i32) -> (i32, i32) {
    %c0_i32 = arith.constant 0 : i32
    %c0_i32_0 = arith.constant 0 : i32
    return %arg0, %c0_i32 : i32, i32
  }
  func.func @transform_1(%arg0: i32) -> (i32, i32) {
    %c0_i32 = arith.constant 0 : i32
    %c0_i32_0 = arith.constant 0 : i32
    %c0_i32_1 = arith.constant 0 : i32
    return %c0_i32, %c0_i32_0 : i32, i32
  }
  func.func @transform_2(%arg0: i32) -> (i32, i32) {
    %c0_i32 = arith.constant 0 : i32
    %c0_i32_0 = arith.constant 0 : i32
    %c0_i32_1 = arith.constant 0 : i32
    return %c0_i32, %c0_i32_0 : i32, i32
  }
  func.func @transform_3(%arg0: i32) -> (i32, i32) {
    %c0_i32 = arith.constant 0 : i32
    %c0_i32_0 = arith.constant 0 : i32
    return %arg0, %c0_i32 : i32, i32
  }
}

module attributes {stable_mosaic.version = 11 : i64} {
  func.func @kernel(%arg0: i32, %arg1: i32, %arg2: memref<4x128xf32, #tpu.memory_space<vmem>>, %arg3: memref<1x1x128xf32, #tpu.memory_space<vmem>>, %arg4: memref<1x1x128xf32, #tpu.memory_space<vmem>>) attributes {dimension_semantics = [#tpu.dimension_semantics<parallel>, #tpu.dimension_semantics<arbitrary>], iteration_bounds = array<i64: 1, 1>, scalar_prefetch = 0 : i64, scratch_operands = 0 : i64, tpu.core_type = #tpu.core_type<tc>, window_params = [{transform_indices = @transform_0, window_bounds = array<i64: 4, 128>}, {transform_indices = @transform_1, window_bounds = array<i64: 1, 1, 128>}, {transform_indices = @transform_2, window_bounds = array<i64: 1, 1, 128>}]} {
    %c0_i32 = arith.constant 0 : i32
    %0 = arith.cmpi eq, %arg1, %c0_i32 : i32
    %1 = arith.extui %0 : i1 to i32
    %c0_i32_0 = arith.constant 0 : i32
    %2 = arith.cmpi ne, %1, %c0_i32_0 : i32
    scf.if %2 {
      %cst_15 = arith.constant 0.000000e+00 : f32
      %21 = vector.broadcast %cst_15 : f32 to vector<1x128xf32>
      %c0_16 = arith.constant 0 : index
      %c0_17 = arith.constant 0 : index
      %c0_18 = arith.constant 0 : index
      %22 = vector.load %arg3[%c0_16, %c0_17, %c0_18] : memref<1x1x128xf32, #tpu.memory_space<vmem>>, vector<1x1x128xf32>
      %23 = vector.shape_cast %22 : vector<1x1x128xf32> to vector<1x128xf32>
      %24 = vector.shape_cast %21 : vector<1x128xf32> to vector<1x1x128xf32>
      tpu.vector_store %arg3[%c0_16, %c0_17, %c0_18], %24 {strides = array<i32>} : memref<1x1x128xf32, #tpu.memory_space<vmem>>, vector<1x1x128xf32>,
      %cst_19 = arith.constant 0.000000e+00 : f32
      %25 = vector.broadcast %cst_19 : f32 to vector<1x128xf32>
      %c0_20 = arith.constant 0 : index
      %c0_21 = arith.constant 0 : index
      %c0_22 = arith.constant 0 : index
      %26 = vector.load %arg4[%c0_20, %c0_21, %c0_22] : memref<1x1x128xf32, #tpu.memory_space<vmem>>, vector<1x1x128xf32>
      %27 = vector.shape_cast %26 : vector<1x1x128xf32> to vector<1x128xf32>
      %28 = vector.shape_cast %25 : vector<1x128xf32> to vector<1x1x128xf32>
      tpu.vector_store %arg4[%c0_20, %c0_21, %c0_22], %28 {strides = array<i32>} : memref<1x1x128xf32, #tpu.memory_space<vmem>>, vector<1x1x128xf32>,
    } else {
    }
    %c0 = arith.constant 0 : index
    %c0_1 = arith.constant 0 : index
    %3 = vector.load %arg2[%c0, %c0_1] : memref<4x128xf32, #tpu.memory_space<vmem>>, vector<4x128xf32>
    %c0_2 = arith.constant 0 : index
    %c0_3 = arith.constant 0 : index
    %c0_4 = arith.constant 0 : index
    %4 = vector.load %arg3[%c0_2, %c0_3, %c0_4] : memref<1x1x128xf32, #tpu.memory_space<vmem>>, vector<1x1x128xf32>
    %5 = vector.shape_cast %4 : vector<1x1x128xf32> to vector<1x128xf32>
    %cst = arith.constant dense<0.000000e+00> : vector<128xf32>
    %6 = vector.multi_reduction <add>, %3, %cst [0] : vector<4x128xf32> to vector<128xf32>
    %7 = vector.shape_cast %6 : vector<128xf32> to vector<1x128xf32>
    %8 = arith.addf %5, %7 : vector<1x128xf32>
    %c0_5 = arith.constant 0 : index
    %c0_6 = arith.constant 0 : index
    %c0_7 = arith.constant 0 : index
    %9 = vector.load %arg3[%c0_5, %c0_6, %c0_7] : memref<1x1x128xf32, #tpu.memory_space<vmem>>, vector<1x1x128xf32>
    %10 = vector.shape_cast %9 : vector<1x1x128xf32> to vector<1x128xf32>
    %11 = vector.shape_cast %8 : vector<1x128xf32> to vector<1x1x128xf32>
    tpu.vector_store %arg3[%c0_5, %c0_6, %c0_7], %11 {strides = array<i32>} : memref<1x1x128xf32, #tpu.memory_space<vmem>>, vector<1x1x128xf32>,
    %c0_8 = arith.constant 0 : index
    %c0_9 = arith.constant 0 : index
    %c0_10 = arith.constant 0 : index
    %12 = vector.load %arg4[%c0_8, %c0_9, %c0_10] : memref<1x1x128xf32, #tpu.memory_space<vmem>>, vector<1x1x128xf32>
    %13 = vector.shape_cast %12 : vector<1x1x128xf32> to vector<1x128xf32>
    %14 = arith.mulf %3, %3 : vector<4x128xf32>
    %cst_11 = arith.constant dense<0.000000e+00> : vector<128xf32>
    %15 = vector.multi_reduction <add>, %14, %cst_11 [0] : vector<4x128xf32> to vector<128xf32>
    %16 = vector.shape_cast %15 : vector<128xf32> to vector<1x128xf32>
    %17 = arith.addf %13, %16 : vector<1x128xf32>
    %c0_12 = arith.constant 0 : index
    %c0_13 = arith.constant 0 : index
    %c0_14 = arith.constant 0 : index
    %18 = vector.load %arg4[%c0_12, %c0_13, %c0_14] : memref<1x1x128xf32, #tpu.memory_space<vmem>>, vector<1x1x128xf32>
    %19 = vector.shape_cast %18 : vector<1x1x128xf32> to vector<1x128xf32>
    %20 = vector.shape_cast %17 : vector<1x128xf32> to vector<1x1x128xf32>
    tpu.vector_store %arg4[%c0_12, %c0_13, %c0_14], %20 {strides = array<i32>} : memref<1x1x128xf32, #tpu.memory_space<vmem>>, vector<1x1x128xf32>,
    return
  }
  func.func @transform_0(%arg0: i32, %arg1: i32) -> (i32, i32) {
    %c1_i32 = arith.constant 1 : i32
    %0 = arith.muli %arg0, %c1_i32 : i32
    %1 = arith.addi %0, %arg1 : i32
    %c0_i32 = arith.constant 0 : i32
    %2 = arith.minsi %1, %c0_i32 : i32
    %c0_i32_0 = arith.constant 0 : i32
    %c0_i32_1 = arith.constant 0 : i32
    return %2, %c0_i32_0 : i32, i32
  }
  func.func @transform_1(%arg0: i32, %arg1: i32) -> (i32, i32, i32) {
    %c0_i32 = arith.constant 0 : i32
    %c0_i32_0 = arith.constant 0 : i32
    %c0_i32_1 = arith.constant 0 : i32
    return %arg0, %c0_i32, %c0_i32_0 : i32, i32, i32
  }
  func.func @transform_2(%arg0: i32, %arg1: i32) -> (i32, i32, i32) {
    %c0_i32 = arith.constant 0 : i32
    %c0_i32_0 = arith.constant 0 : i32
    %c0_i32_1 = arith.constant 0 : i32
    return %arg0, %c0_i32, %c0_i32_0 : i32, i32, i32
  }
}

</mosaic_0001>

<llo_original>
// kernel: tile.19
$region0: #{tile.19}
  %s0 = inlined_call_operand.vmem [shape: f32[4,32], index: 0, kind: input, shape index: {}]
  %s1 = inlined_call_operand.vmem [shape: f32[1,128], index: 1, kind: output, shape index: {}]
  $region1: #{tile.19} parent=0
    #allocation0 [shape = 'u8[4096]{0}', space=vmem, size = 0x1000, scoped, tag = 'scoped mem for output reshape']
    #allocation1 [shape = 'u8[4096]{0}', space=vmem, size = 0x1000, scoped, tag = 'scoped mem for input reshape']
    %s3 = sshll.u32 1, 4
    %s4 = ssub.s32 %s3, 1
    %v5 = vld [vmem:[%s0] sm:%s4]
    %6 = vst [vmem:[#allocation1] sm:%s4] %v5
    %v7 = vld [vmem:[#allocation1] sm:$0x1]
    %vm8 = vcmask 261120
    %9 = vst.msk [vmem:[#allocation0] sm:$0x1] %vm8, %v7
    %s10 = scalar_lea.vmem [#allocation1], 3
    %v11 = vld [vmem:[%s10] sm:$0x1]
    %12 = vrot.lane.b32.xlu0 %v11, 96
    %v13 = vpop.permute.xlu0 %12
    %vm14 = vcmask 1048320
    %15 = vst.msk [vmem:[#allocation0] sm:$0x1] %vm14, %v13
    %s16 = scalar_lea.vmem [#allocation1], 2
    %v17 = vld [vmem:[%s16] sm:$0x1]
    %18 = vrot.lane.b32.xlu0 %v17, 64
    %v19 = vpop.permute.xlu0 %18
    %vm20 = vcmask 785920
    %21 = vst.msk [vmem:[#allocation0] sm:$0x1] %vm20, %v19
    %s22 = scalar_lea.vmem [#allocation1], 1
    %v23 = vld [vmem:[%s22] sm:$0x1]
    %24 = vrot.lane.b32.xlu0 %v23, 32
    %v25 = vpop.permute.xlu0 %24
    %vm26 = vcmask 523520
    %27 = vst.msk [vmem:[#allocation0] sm:$0x1] %vm26, %v25
    %s29 = sshll.u32 1, 1
    %s30 = ssub.s32 %s29, 1
    %v32 = vld [vmem:[#allocation0] sm:%s30]
    %s33 = sshll.u32 1, 1
    %s34 = ssub.s32 %s33, 1
    %35 = vst [vmem:[%s1] sm:%s34] %v32

// kernel: tile.18
$region0: #{tile.18}
  #allocation0 [shape = 's32[1]{0}', space=sflag, size = 0x4, scoped, tag = 'scoped memory for tile.18']
  %s0 = inlined_call_operand.vmem [shape: f32[32], index: 0, kind: input, shape index: {}]
  %s1 = inlined_call_operand.vmem [shape: f32[4,32], index: 1, kind: output, shape index: {}]
  // Predicated region
  $region2: #{tile.18} parent=0 // pred_check
    _
  $region3: #{tile.18} parent=0 // pred_check_branch
    %3 = sbr.rel (0) target = $region5
  $region4: #{tile.18} parent=0 // pred_region
    _
  $region5: #{tile.18} parent=0 // pred_fallthru
    _
  %v4 = vld [vmem:[%s0] ss:$0 sm:$0xff]
  %5 = vst [vmem:[%s1] sm:$0xf] %v4

// kernel: normalization_batch.3
$region0: #{normalization_batch.3}
  #allocation0 [shape = 'u32[]', space=smem, size = 0x4, offset = 0x4, fixed_abs, tag = 'smem constant byte address 0x4 - core index']
  #allocation1 [shape = 'u32[144,128]{1,0:T(1,128)}', space=vmem, size = 0x12000, scoped, tag = 'internal scratch']
  %s0 = inlined_call_operand.vmem [shape: f32[4,128], index: 0, kind: input, shape index: {}]
  %s1 = inlined_call_operand.vmem [shape: f32[1,128], index: 1, kind: input, shape index: {}]
  %s2 = inlined_call_operand.vmem [shape: f32[1,128], index: 2, kind: input, shape index: {}]
  %s3 = inlined_call_operand.vmem [shape: f32[4,128], index: 3, kind: output, shape index: {}]
  %s4 = sld [smem:[#allocation0]]
  $region22: #{normalization_batch.3} parent=0
    _
  %s6 = ssub.s32 1, %s4
  %s7 = scalar_select 0, %s6, %s4
  // Predicated region
  $region2: #{normalization_batch.3} parent=0 // pred_check
    _
  $region3: #{normalization_batch.3} parent=0 // pred_check_branch
    %9 = sbr.rel (0) target = $region5
  $region4: #{normalization_batch.3} parent=0 // pred_region
    _
  $region5: #{normalization_batch.3} parent=0 // pred_fallthru
    _
  // Predicated region
  $region6: #{normalization_batch.3} parent=0 // pred_check
    _
  $region7: #{normalization_batch.3} parent=0 // pred_check_branch
    %11 = sbr.rel (0) target = $region9
  $region8: #{normalization_batch.3} parent=0 // pred_region
    _
  $region9: #{normalization_batch.3} parent=0 // pred_fallthru
    _
  // Predicated region
  $region10: #{normalization_batch.3} parent=0 // pred_check
    _
  $region11: #{normalization_batch.3} parent=0 // pred_check_branch
    %13 = sbr.rel (0) target = $region13
  $region12: #{normalization_batch.3} parent=0 // pred_region
    _
  $region13: #{normalization_batch.3} parent=0 // pred_fallthru
    _
  %v14 = vld [vmem:[%s0] sm:$0xf]
  %v15 = vld [vmem:[%s1] sm:$0x1]
  %v17 = vlaneseq
  %v18 = vshrl.u32 %v17, 7
  %v19 = vsub.s32 0, %v18
  %v20 = vrot.slane %v15, %v19
  %v22 = vmul.f32 %v14, %v20
  %v23 = vld [vmem:[%s2] sm:$0x1]
  %v25 = vlaneseq
  %v26 = vshrl.u32 %v25, 7
  %v27 = vsub.s32 0, %v26
  %v28 = vrot.slane %v23, %v27
  %v30 = vadd.f32 %v22, %v28
  %31 = vst [vmem:[%s3] sm:$0xf] %v30
  // Predicated region
  $region14: #{normalization_batch.3} parent=0 // pred_check
    _
  $region15: #{normalization_batch.3} parent=0 // pred_check_branch
    %33 = sbr.rel (0) target = $region17
  $region16: #{normalization_batch.3} parent=0 // pred_region
    _
  $region17: #{normalization_batch.3} parent=0 // pred_fallthru
    _
  // Predicated region
  $region18: #{normalization_batch.3} parent=0 // pred_check
    _
  $region19: #{normalization_batch.3} parent=0 // pred_check_branch
    %35 = sbr.rel (0) target = $region21
  $region20: #{normalization_batch.3} parent=0 // pred_region
    _
  $region21: #{normalization_batch.3} parent=0 // pred_fallthru
    _

// kernel: normalization_batch.2
$region0: #{normalization_batch.2}
  #allocation0 [shape = 'u32[]', space=smem, size = 0x4, offset = 0x4, fixed_abs, tag = 'smem constant byte address 0x4 - core index']
  #allocation1 [shape = 'u32[144,128]{1,0:T(1,128)}', space=vmem, size = 0x12000, scoped, tag = 'internal scratch']
  %s0 = inlined_call_operand.vmem [shape: f32[4,128], index: 0, kind: input, shape index: {}]
  %s1 = inlined_call_operand.vmem [shape: f32[1,1,128], index: 1, kind: output, shape index: {0}]
  %s2 = inlined_call_operand.vmem [shape: f32[1,1,128], index: 2, kind: output, shape index: {1}]
  %3 = xla_tuple %s1, %s2
  %s4 = sld [smem:[#allocation0]]
  $region26: #{normalization_batch.2} parent=0
    _
  %s6 = ssub.s32 1, %s4
  %s7 = scalar_select 0, %s6, %s4
  // Predicated region
  $region2: #{normalization_batch.2} parent=0 // pred_check
    _
  $region3: #{normalization_batch.2} parent=0 // pred_check_branch
    %9 = sbr.rel (0) target = $region5
  $region4: #{normalization_batch.2} parent=0 // pred_region
    %s10 = sadd.s32 0, 0
    %p11 = scmp.lt.s32.totalorder %s10, 0
    %s12 = scalar_select %p11, %s10, 0
    %p13 = scmp.lt.s32.totalorder %s12, 0
    %s14 = scalar_select %p13, %s12, 0
    %s15 = smul.addr %s14, 4
    %s16 = scalar_lea.vmem %s0, %s15
    %s17 = sadd.s32 0, 0
    %p18 = scmp.lt.s32.totalorder %s17, 0
    %s19 = scalar_select %p18, %s17, 0
  $region5: #{normalization_batch.2} parent=0 // pred_fallthru
    _
  %s20 = sadd.s32 0, 0
  %p21 = scmp.lt.s32.totalorder %s20, 0
  %s22 = scalar_select %p21, %s20, 0
  %p23 = scmp.lt.s32.totalorder %s22, 0
  %s24 = scalar_select %p23, %s22, 0
  %s25 = smul.addr %s24, 4
  %s26 = scalar_lea.vmem %s0, %s25
  %s27 = sadd.s32 0, 0
  %p28 = scmp.lt.s32.totalorder %s27, 0
  %s29 = scalar_select %p28, %s27, 0
  %p30 = scmp.lt.s32.totalorder %s29, 0
  %s31 = scalar_select %p30, %s29, 0
  %s32 = smul.addr %s31, 4
  %s33 = scalar_lea.vmem %s0, %s32
  %s34 = sadd.s32 0, 0
  %p35 = scmp.lt.s32.totalorder %s34, 0
  %s36 = scalar_select %p35, %s34, 0
  %p37 = scmp.eq.s32.totalorder 0, 0
  // Predicated region
  $region6: #{normalization_batch.2} parent=0 // pred_check
    %p38 = pneg %p37
  $region7: #{normalization_batch.2} parent=0 // pred_check_branch
    %40 = sbr.rel (%p38) target = $region9
  $region8: #{normalization_batch.2} parent=0 // pred_region
    %41 = vst [vmem:[%s1] sm:$0x1] 0.0
    %42 = vst [vmem:[%s2] sm:$0x1] 0.0
  $region9: #{normalization_batch.2} parent=0 // pred_fallthru
    _
  %v43 = vld [vmem:[%s33] sm:$0xf]
  %v44 = vld [vmem:[%s1] sm:$0x1]
  %vm45 = vcmask 1043456
  %v46 = vsel %vm45, %v43, 0.0
  %v47 = vrot.slane %v46, 4
  %v48 = vadd.f32 %v46, %v47
  %v49 = vrot.slane %v48, 2
  %v50 = vadd.f32 %v48, %v49
  %v51 = vrot.slane %v50, 1
  %v52 = vadd.f32 %v50, %v51
  %v53 = vadd.f32 %v44, %v52
  %54 = vst [vmem:[%s1] sm:$0x1] %v53
  %v55 = vld [vmem:[%s2] sm:$0x1]
  %v56 = vmul.f32 %v43, %v43
  %v57 = vsel %vm45, %v56, 0.0
  %v58 = vrot.slane %v57, 4
  %v59 = vadd.f32 %v57, %v58
  %v60 = vrot.slane %v59, 2
  %v61 = vadd.f32 %v59, %v60
  %v62 = vrot.slane %v61, 1
  %v63 = vadd.f32 %v61, %v62
  %v64 = vadd.f32 %v55, %v63
  %65 = vst [vmem:[%s2] sm:$0x1] %v64
  // Predicated region
  $region10: #{normalization_batch.2} parent=0 // pred_check
    _
  $region11: #{normalization_batch.2} parent=0 // pred_check_branch
    %67 = sbr.rel (0) target = $region13
  $region12: #{normalization_batch.2} parent=0 // pred_region
    _
  $region13: #{normalization_batch.2} parent=0 // pred_fallthru
    _
  // Predicated region
  $region14: #{normalization_batch.2} parent=0 // pred_check
    _
  $region15: #{normalization_batch.2} parent=0 // pred_check_branch
    %69 = sbr.rel (0) target = $region17
  $region16: #{normalization_batch.2} parent=0 // pred_region
    _
  $region17: #{normalization_batch.2} parent=0 // pred_fallthru
    _
  // Predicated region
  $region18: #{normalization_batch.2} parent=0 // pred_check
    _
  $region19: #{normalization_batch.2} parent=0 // pred_check_branch
    %71 = sbr.rel (0) target = $region21
  $region20: #{normalization_batch.2} parent=0 // pred_region
    _
  $region21: #{normalization_batch.2} parent=0 // pred_fallthru
    _
  // Predicated region
  $region22: #{normalization_batch.2} parent=0 // pred_check
    _
  $region23: #{normalization_batch.2} parent=0 // pred_check_branch
    %73 = sbr.rel (0) target = $region25
  $region24: #{normalization_batch.2} parent=0 // pred_region
    _
  $region25: #{normalization_batch.2} parent=0 // pred_fallthru
    _

</llo_original>
